<compile_context>
chip_gen: v5e
topology: v5e:2x2
jax: 0.10.0
libtpu: 0.0.40
codegen_flags: <defaults>
</compile_context>

<pallas_src>
import jax
import jax.numpy as jnp
import numpy as np
from jax.experimental import pallas as pl
from jax.experimental.pallas import tpu as pltpu


# ----------------------------------------------------------------------------- helpers
def _torch_pad_width(ndim, padding):
    """F.pad semantics: padding pairs apply to trailing dims first."""
    pad_width = [(0, 0)] * ndim
    for i in range(len(padding) // 2):
        d = ndim - 1 - i
        pad_width[d] = (padding[2 * i], padding[2 * i + 1])
    return pad_width


def _vmem_capacity_bytes():
    """Best-effort VMEM capacity query; falls back to the v7x-safe 64 MiB."""
    default = 64 << 20
    try:
        info = pltpu.get_tpu_info()
    except Exception:
        return default
    for attr in ("vmem_capacity_bytes", "vmem_size_bytes", "vmem_bytes"):
        v = getattr(info, attr, None)
        if isinstance(v, (int, np.integer)) and int(v) > 0:
            return int(v)
    return default


# ----------------------------------------------------------------------------- forward
def causal_encoder_forward(x, params, *, kernel_size, stride, padding, eps=1e-5):
    kT, kF = kernel_size
    sT, sF = stride
    assert sT == 1, "DPCRN causal encoder uses time stride 1"
    B = x.shape[0]
    Cout = params["w"].shape[0]

    # --- F.pad (glue) --------------------------------------------------------
    xp = jnp.pad(x, _torch_pad_width(x.ndim, padding))
    _, Tp, Fp, Cin = xp.shape
    To = Tp - kT + 1                       # time stride 1
    Fo = (Fp - kF) // sF + 1               # strided freq output
    kG = (kF - 1) // sF + 1                # folded (stride-1) freq taps
    Fg = Fo + kG - 1                       # folded freq extent
    Ft = Fg * sF
    Cg = sF * Cin                          # folded channel count
    Cgp = max(8, -(-Cg // 8) * 8)          # pad to sublane multiple
    Lin = (Tp + 1) * Fg                    # +1 zero time row of slack for shifted reads
    Lout = To * Fg
    nkk = kT * kG

    # --- fold freq stride into channels (no duplication, one fused XLA copy) --
    if Ft <= Fp:
        xf = xp[:, :, :Ft, :]
    else:
        xf = jnp.pad(xp, ((0, 0), (0, 0), (0, Ft - Fp), (0, 0)))
    xf = xf.reshape(B, Tp, Fg, Cg)                                   # (g, p*Cin+c)
    xf = jnp.pad(xf, ((0, 0), (0, 0), (0, 0), (0, Cgp - Cg)))
    xt = jnp.transpose(xf, (0, 3, 1, 2)).reshape(B, Cgp, Tp * Fg)    # channels-first
    xt = jnp.pad(xt, ((0, 0), (0, 0), (0, Fg))).astype(jnp.bfloat16)  # (B, Cgp, Lin)

    # --- fold the weights the same way: (kT*kG, Cout, Cgp), zero-padded taps ---
    w = params["w"].astype(jnp.float32)                              # (Cout,Cin,kT,kF)
    w = jnp.pad(w, ((0, 0), (0, 0), (0, 0), (0, kG * sF - kF)))
    w = w.reshape(Cout, Cin, kT, kG, sF)
    w = jnp.transpose(w, (2, 3, 4, 1, 0)).reshape(nkk, Cg, Cout)
    w = jnp.transpose(w, (0, 2, 1))
    w = jnp.pad(w, ((0, 0), (0, 0), (0, Cgp - Cg))).astype(jnp.bfloat16)

    gamma = params["gamma"].reshape(Cout, 1).astype(jnp.float32)
    beta = params["beta"].reshape(Cout, 1).astype(jnp.float32)
    alpha = params["alpha"].astype(jnp.float32)                      # (1,) PReLU slope
    # params["b"] intentionally unused: training-mode BN mean subtraction cancels it.

    # lane-validity mask: the last kG-1 folded-freq columns per time row are garbage
    valid = (jnp.arange(Lout) % Fg < Fo).astype(jnp.float32).reshape(1, Lout)
    inv_M = 1.0 / float(B * To * Fo)

    # --- kernel ---------------------------------------------------------------
    def kernel(w_ref, x_ref, g_ref, b_ref, m_ref, a_ref, o_ref, sum_ref, ssq_ref):
        p = pl.program_id(0)       # 0: stats pass, 1: apply pass
        bb = pl.program_id(1)      # batch element

        @pl.when((p == 0) & (bb == 0))
        def _init():
            sum_ref[...] = jnp.zeros_like(sum_ref)
            ssq_ref[...] = jnp.zeros_like(ssq_ref)

        # Conv for this batch element: kT*kG shifted MXU matmuls on the folded,
        # channels-first input block (in-kernel window building, no im2col).
        acc = jnp.zeros((Cout, Lout), jnp.float32)
        for kt in range(kT):
            for dg in range(kG):
                off = kt * Fg + dg
                acc = acc + jnp.dot(
                    w_ref[kt * kG + dg],               # (Cout, Cgp) bf16
                    x_ref[:, pl.ds(off, Lout)],        # (Cgp, Lout) bf16, shifted window
                    preferred_element_type=jnp.float32)

        @pl.when(p == 0)
        def _stats():
            av = acc * m_ref[...]                       # mask garbage tail columns
            sum_ref[...] += jnp.sum(av, axis=1, keepdims=True)
            ssq_ref[...] += jnp.sum(av * av, axis=1, keepdims=True)

        @pl.when(p == 1)
        def _apply():
            mean = sum_ref[...] * inv_M                               # (Cout, 1)
            var = jnp.maximum(ssq_ref[...] * inv_M - mean * mean, 0.0)
            scale = g_ref[...] * jax.lax.rsqrt(var + eps)             # EUP rsqrt
            shift = b_ref[...] - mean * scale
            y = acc * scale + shift
            a = a_ref[0]                                              # PReLU slope (SMEM)
            o_ref[...] = jnp.where(y >= 0.0, y, a * y).astype(o_ref.dtype)

    # --- VMEM budget / cost hint ----------------------------------------------
    xbytes = Cgp * Lin * 2
    obytes = Cout * Lout * 2
    vmem_est = 2 * xbytes + 2 * obytes + 6 * Cout * Lout * 4 + nkk * Cout * Cgp * 2 + (64 << 10)
    vmem_cap = _vmem_capacity_bytes()
    vmem_limit = int(min(max(2 * vmem_est, 8 << 20), int(0.75 * vmem_cap)))
    assert vmem_est <= vmem_limit, (
        "per-batch time block does not fit VMEM; TODO(synk): halo'd time tiling")

    cost = pl.CostEstimate(
        flops=2 * nkk * 2 * Cout * Cgp * Lout * B,
        transcendentals=B * Cout,
        bytes_accessed=2 * B * xbytes + B * obytes + nkk * Cout * Cgp * 2,
    )

    out_flat = pl.pallas_call(
        kernel,
        grid=(2, B),                                   # (phase, batch), both sequential
        in_specs=[
            pl.BlockSpec((nkk, Cout, Cgp), lambda p, b: (0, 0, 0)),   # folded weights
            pl.BlockSpec((None, Cgp, Lin), lambda p, b: (b, 0, 0)),   # per-batch input
            pl.BlockSpec((Cout, 1), lambda p, b: (0, 0)),             # gamma
            pl.BlockSpec((Cout, 1), lambda p, b: (0, 0)),             # beta
            pl.BlockSpec((1, Lout), lambda p, b: (0, 0)),             # validity mask
            pl.BlockSpec(memory_space=pltpu.MemorySpace.SMEM),        # PReLU slope
        ],
        # phase 0 never writes; park its (unflushed) block index at 0, phase 1
        # writes per-batch blocks which pipeline out while the next batch computes.
        out_specs=pl.BlockSpec((None, Cout, Lout), lambda p, b: (b * p, 0, 0)),
        out_shape=jax.ShapeDtypeStruct((B, Cout, Lout), jnp.bfloat16),
        scratch_shapes=[
            pltpu.VMEM((Cout, 1), jnp.float32),        # per-channel sum
            pltpu.VMEM((Cout, 1), jnp.float32),        # per-channel sum of squares
        ],
        compiler_params=pltpu.CompilerParams(
            dimension_semantics=("arbitrary", "arbitrary"),
            vmem_limit_bytes=vmem_limit,
        ),
        cost_estimate=cost,
    )(w, xt, gamma, beta, valid, alpha)

    # Layout plumbing back to torch's (B, T_out, F_out, Cout); drop folded-tail cols.
    out = out_flat.reshape(B, Cout, To, Fg)[:, :, :, :Fo]
    return jnp.transpose(out, (0, 2, 3, 1)).astype(jnp.float32)


# ----------------------------------------------------------------------------- reference
def _reference(x, params, *, kernel_size, stride, padding):
    xp = jnp.pad(x, _torch_pad_width(x.ndim, padding))
    w = jnp.transpose(params["w"], (2, 3, 1, 0))         # HWIO
    conv = jax.lax.conv_general_dilated(
        xp, w, window_strides=stride, padding="VALID",
        dimension_numbers=("NHWC", "HWIO", "NHWC"),
        preferred_element_type=jnp.float32,
    ) + params["b"]
    mean = conv.mean(axis=(0, 1, 2))
    var = conv.var(axis=(0, 1, 2))                       # biased, as BN uses to normalize
    y = (conv - mean) * jax.lax.rsqrt(var + 1e-5) * params["gamma"] + params["beta"]
    a = params["alpha"][0]
    return jnp.where(y >= 0, y, a * y)


# ----------------------------------------------------------------------------- main
if __name__ == "__main__":
    key = jax.random.PRNGKey(0)
    B, T, F_, Cin = 2, 8, 16, 3
    Cout = 8
    kernel_size = (2, 5)
    stride = (1, 2)
    # torch F.pad order for a (B,T,F,C) tensor: (C_l, C_r, F_l, F_r, T_l, T_r)
    # -> symmetric freq pad of 2, causal time pad of (kT-1, 0)
    padding = [0, 0, 2, 2, 1, 0]

    ks = jax.random.split(key, 5)
    x = jax.random.normal(ks[0], (B, T, F_, Cin), jnp.float32)
    params = {
        "w": 0.1 * jax.random.normal(ks[1], (Cout, Cin, kernel_size[0], kernel_size[1]), jnp.float32),
        "b": 0.1 * jax.random.normal(ks[2], (Cout,), jnp.float32),
        "gamma": 1.0 + 0.1 * jax.random.normal(ks[3], (Cout,), jnp.float32),
        "beta": 0.1 * jax.random.normal(ks[4], (Cout,), jnp.float32),
        "alpha": jnp.full((1,), 0.25, jnp.float32),       # nn.PReLU() default init
    }

    out = causal_encoder_forward(x, params, kernel_size=kernel_size, stride=stride, padding=padding)
    out = jax.block_until_ready(out)

    ref = _reference(x, params, kernel_size=kernel_size, stride=stride, padding=padding)
    assert out.shape == ref.shape == (B, 8, 8, Cout), (out.shape, ref.shape)
    np.testing.assert_allclose(np.asarray(out), np.asarray(ref), rtol=5e-2, atol=5e-2)

    print("KERNEL_OK")
</pallas_src>

<mosaic_0001>
module attributes {stable_mosaic.version = 11 : i64} {
  func.func @kernel(%arg0: i32, %arg1: i32, %arg2: memref<6x8x8xbf16, #tpu.memory_space<vmem>>, %arg3: memref<1x8x100xbf16, #tpu.memory_space<vmem>>, %arg4: memref<8x1xf32, #tpu.memory_space<vmem>>, %arg5: memref<8x1xf32, #tpu.memory_space<vmem>>, %arg6: memref<1x80xf32, #tpu.memory_space<vmem>>, %arg7: memref<1xf32, #tpu.memory_space<smem>>, %arg8: memref<1x8x80xbf16, #tpu.memory_space<vmem>>, %arg9: memref<8x1xf32, #tpu.memory_space<vmem>>, %arg10: memref<8x1xf32, #tpu.memory_space<vmem>>) attributes {dimension_semantics = [#tpu.dimension_semantics<arbitrary>, #tpu.dimension_semantics<arbitrary>], iteration_bounds = array<i64: 2, 2>, scalar_prefetch = 0 : i64, scratch_operands = 2 : i64, tpu.core_type = #tpu.core_type<tc>, window_params = [{pipeline_mode = #tpu.pipeline_mode<synchronous>, transform_indices = @transform_0, window_bounds = array<i64: 6, 8, 8>}, {transform_indices = @transform_1, window_bounds = array<i64: 1, 8, 100>}, {pipeline_mode = #tpu.pipeline_mode<synchronous>, transform_indices = @transform_2, window_bounds = array<i64: 8, 1>}, {pipeline_mode = #tpu.pipeline_mode<synchronous>, transform_indices = @transform_3, window_bounds = array<i64: 8, 1>}, {pipeline_mode = #tpu.pipeline_mode<synchronous>, transform_indices = @transform_4, window_bounds = array<i64: 1, 80>}, {transform_indices = @transform_5, window_bounds = array<i64: 1>}, {transform_indices = @transform_6, window_bounds = array<i64: 1, 8, 80>}]} {
    %c0_i32 = arith.constant 0 : i32
    %0 = arith.cmpi eq, %arg0, %c0_i32 : i32
    %c0_i32_0 = arith.constant 0 : i32
    %1 = arith.cmpi eq, %arg1, %c0_i32_0 : i32
    %2 = arith.andi %0, %1 : i1
    %3 = arith.extui %2 : i1 to i32
    %c0_i32_1 = arith.constant 0 : i32
    %4 = arith.cmpi ne, %3, %c0_i32_1 : i32
    scf.if %4 {
      %cst_38 = arith.constant 0.000000e+00 : f32
      %48 = vector.broadcast %cst_38 : f32 to vector<8x1xf32>
      %c0_39 = arith.constant 0 : index
      %c0_40 = arith.constant 0 : index
      %49 = vector.load %arg9[%c0_39, %c0_40] : memref<8x1xf32, #tpu.memory_space<vmem>>, vector<8x1xf32>
      tpu.vector_store %arg9[%c0_39, %c0_40], %48 {strides = array<i32>} : memref<8x1xf32, #tpu.memory_space<vmem>>, vector<8x1xf32>,
      %cst_41 = arith.constant 0.000000e+00 : f32
      %50 = vector.broadcast %cst_41 : f32 to vector<8x1xf32>
      %c0_42 = arith.constant 0 : index
      %c0_43 = arith.constant 0 : index
      %51 = vector.load %arg10[%c0_42, %c0_43] : memref<8x1xf32, #tpu.memory_space<vmem>>, vector<8x1xf32>
      tpu.vector_store %arg10[%c0_42, %c0_43], %50 {strides = array<i32>} : memref<8x1xf32, #tpu.memory_space<vmem>>, vector<8x1xf32>,
    } else {
    }
    %cst = arith.constant 0.000000e+00 : f32
    %5 = vector.broadcast %cst : f32 to vector<8x80xf32>
    %c0 = arith.constant 0 : index
    %c0_2 = arith.constant 0 : index
    %c0_3 = arith.constant 0 : index
    %6 = vector.load %arg2[%c0, %c0_2, %c0_3] : memref<6x8x8xbf16, #tpu.memory_space<vmem>>, vector<1x8x8xbf16>
    %7 = vector.shape_cast %6 : vector<1x8x8xbf16> to vector<8x8xbf16>
    %c0_4 = arith.constant 0 : index
    %c0_5 = arith.constant 0 : index
    %c0_6 = arith.constant 0 : index
    %8 = vector.load %arg3[%c0_4, %c0_5, %c0_6] : memref<1x8x100xbf16, #tpu.memory_space<vmem>>, vector<1x8x80xbf16>
    %9 = vector.shape_cast %8 : vector<1x8x80xbf16> to vector<8x80xbf16>
    %cst_7 = arith.constant dense<0.000000e+00> : vector<8x80xf32>
    %10 = tpu.matmul %7, %9, %cst_7 {dimension_numbers = #tpu.dot_dimension_numbers<[1], [0], [0], [1], [0, 0, 1, 1], [], []>} : vector<8x8xbf16>, vector<8x80xbf16>, vector<8x80xf32> -> vector<8x80xf32>
    %11 = arith.addf %5, %10 : vector<8x80xf32>
    %c1 = arith.constant 1 : index
    %c0_8 = arith.constant 0 : index
    %c0_9 = arith.constant 0 : index
    %12 = vector.load %arg2[%c1, %c0_8, %c0_9] : memref<6x8x8xbf16, #tpu.memory_space<vmem>>, vector<1x8x8xbf16>
    %13 = vector.shape_cast %12 : vector<1x8x8xbf16> to vector<8x8xbf16>
    %c0_10 = arith.constant 0 : index
    %c0_11 = arith.constant 0 : index
    %c1_12 = arith.constant 1 : index
    %14 = vector.load %arg3[%c0_10, %c0_11, %c1_12] : memref<1x8x100xbf16, #tpu.memory_space<vmem>>, vector<1x8x80xbf16>
    %15 = vector.shape_cast %14 : vector<1x8x80xbf16> to vector<8x80xbf16>
    %cst_13 = arith.constant dense<0.000000e+00> : vector<8x80xf32>
    %16 = tpu.matmul %13, %15, %cst_13 {dimension_numbers = #tpu.dot_dimension_numbers<[1], [0], [0], [1], [0, 0, 1, 1], [], []>} : vector<8x8xbf16>, vector<8x80xbf16>, vector<8x80xf32> -> vector<8x80xf32>
    %17 = arith.addf %11, %16 : vector<8x80xf32>
    %c2 = arith.constant 2 : index
    %c0_14 = arith.constant 0 : index
    %c0_15 = arith.constant 0 : index
    %18 = vector.load %arg2[%c2, %c0_14, %c0_15] : memref<6x8x8xbf16, #tpu.memory_space<vmem>>, vector<1x8x8xbf16>
    %19 = vector.shape_cast %18 : vector<1x8x8xbf16> to vector<8x8xbf16>
    %c0_16 = arith.constant 0 : index
    %c0_17 = arith.constant 0 : index
    %c2_18 = arith.constant 2 : index
    %20 = vector.load %arg3[%c0_16, %c0_17, %c2_18] : memref<1x8x100xbf16, #tpu.memory_space<vmem>>, vector<1x8x80xbf16>
    %21 = vector.shape_cast %20 : vector<1x8x80xbf16> to vector<8x80xbf16>
    %cst_19 = arith.constant dense<0.000000e+00> : vector<8x80xf32>
    %22 = tpu.matmul %19, %21, %cst_19 {dimension_numbers = #tpu.dot_dimension_numbers<[1], [0], [0], [1], [0, 0, 1, 1], [], []>} : vector<8x8xbf16>, vector<8x80xbf16>, vector<8x80xf32> -> vector<8x80xf32>
    %23 = arith.addf %17, %22 : vector<8x80xf32>
    %c3 = arith.constant 3 : index
    %c0_20 = arith.constant 0 : index
    %c0_21 = arith.constant 0 : index
    %24 = vector.load %arg2[%c3, %c0_20, %c0_21] : memref<6x8x8xbf16, #tpu.memory_space<vmem>>, vector<1x8x8xbf16>
    %25 = vector.shape_cast %24 : vector<1x8x8xbf16> to vector<8x8xbf16>
    %c0_22 = arith.constant 0 : index
    %c0_23 = arith.constant 0 : index
    %c10 = arith.constant 10 : index
    %26 = vector.load %arg3[%c0_22, %c0_23, %c10] : memref<1x8x100xbf16, #tpu.memory_space<vmem>>, vector<1x8x80xbf16>
    %27 = vector.shape_cast %26 : vector<1x8x80xbf16> to vector<8x80xbf16>
    %cst_24 = arith.constant dense<0.000000e+00> : vector<8x80xf32>
    %28 = tpu.matmul %25, %27, %cst_24 {dimension_numbers = #tpu.dot_dimension_numbers<[1], [0], [0], [1], [0, 0, 1, 1], [], []>} : vector<8x8xbf16>, vector<8x80xbf16>, vector<8x80xf32> -> vector<8x80xf32>
    %29 = arith.addf %23, %28 : vector<8x80xf32>
    %c4 = arith.constant 4 : index
    %c0_25 = arith.constant 0 : index
    %c0_26 = arith.constant 0 : index
    %30 = vector.load %arg2[%c4, %c0_25, %c0_26] : memref<6x8x8xbf16, #tpu.memory_space<vmem>>, vector<1x8x8xbf16>
    %31 = vector.shape_cast %30 : vector<1x8x8xbf16> to vector<8x8xbf16>
    %c0_27 = arith.constant 0 : index
    %c0_28 = arith.constant 0 : index
    %c11 = arith.constant 11 : index
    %32 = vector.load %arg3[%c0_27, %c0_28, %c11] : memref<1x8x100xbf16, #tpu.memory_space<vmem>>, vector<1x8x80xbf16>
    %33 = vector.shape_cast %32 : vector<1x8x80xbf16> to vector<8x80xbf16>
    %cst_29 = arith.constant dense<0.000000e+00> : vector<8x80xf32>
    %34 = tpu.matmul %31, %33, %cst_29 {dimension_numbers = #tpu.dot_dimension_numbers<[1], [0], [0], [1], [0, 0, 1, 1], [], []>} : vector<8x8xbf16>, vector<8x80xbf16>, vector<8x80xf32> -> vector<8x80xf32>
    %35 = arith.addf %29, %34 : vector<8x80xf32>
    %c5 = arith.constant 5 : index
    %c0_30 = arith.constant 0 : index
    %c0_31 = arith.constant 0 : index
    %36 = vector.load %arg2[%c5, %c0_30, %c0_31] : memref<6x8x8xbf16, #tpu.memory_space<vmem>>, vector<1x8x8xbf16>
    %37 = vector.shape_cast %36 : vector<1x8x8xbf16> to vector<8x8xbf16>
    %c0_32 = arith.constant 0 : index
    %c0_33 = arith.constant 0 : index
    %c12 = arith.constant 12 : index
    %38 = vector.load %arg3[%c0_32, %c0_33, %c12] : memref<1x8x100xbf16, #tpu.memory_space<vmem>>, vector<1x8x80xbf16>
    %39 = vector.shape_cast %38 : vector<1x8x80xbf16> to vector<8x80xbf16>
    %cst_34 = arith.constant dense<0.000000e+00> : vector<8x80xf32>
    %40 = tpu.matmul %37, %39, %cst_34 {dimension_numbers = #tpu.dot_dimension_numbers<[1], [0], [0], [1], [0, 0, 1, 1], [], []>} : vector<8x8xbf16>, vector<8x80xbf16>, vector<8x80xf32> -> vector<8x80xf32>
    %41 = arith.addf %35, %40 : vector<8x80xf32>
    %c0_i32_35 = arith.constant 0 : i32
    %42 = arith.cmpi eq, %arg0, %c0_i32_35 : i32
    %43 = arith.extui %42 : i1 to i32
    %c0_i32_36 = arith.constant 0 : i32
    %44 = arith.cmpi ne, %43, %c0_i32_36 : i32
    scf.if %44 {
      %c0_38 = arith.constant 0 : index
      %c0_39 = arith.constant 0 : index
      %48 = vector.load %arg6[%c0_38, %c0_39] : memref<1x80xf32, #tpu.memory_space<vmem>>, vector<1x80xf32>
      %49 = vector.broadcast %48 : vector<1x80xf32> to vector<8x80xf32>
      %50 = arith.mulf %41, %49 : vector<8x80xf32>
      %c0_40 = arith.constant 0 : index
      %c0_41 = arith.constant 0 : index
      %51 = vector.load %arg9[%c0_40, %c0_41] : memref<8x1xf32, #tpu.memory_space<vmem>>, vector<8x1xf32>
      %cst_42 = arith.constant dense<0.000000e+00> : vector<8xf32>
      %52 = vector.multi_reduction <add>, %50, %cst_42 [1] : vector<8x80xf32> to vector<8xf32>
      %53 = vector.shape_cast %52 : vector<8xf32> to vector<8x1xf32>
      %54 = arith.addf %51, %53 : vector<8x1xf32>
      %c0_43 = arith.constant 0 : index
      %c0_44 = arith.constant 0 : index
      %55 = vector.load %arg9[%c0_43, %c0_44] : memref<8x1xf32, #tpu.memory_space<vmem>>, vector<8x1xf32>
      tpu.vector_store %arg9[%c0_43, %c0_44], %54 {strides = array<i32>} : memref<8x1xf32, #tpu.memory_space<vmem>>, vector<8x1xf32>,
      %c0_45 = arith.constant 0 : index
      %c0_46 = arith.constant 0 : index
      %56 = vector.load %arg10[%c0_45, %c0_46] : memref<8x1xf32, #tpu.memory_space<vmem>>, vector<8x1xf32>
      %57 = arith.mulf %50, %50 : vector<8x80xf32>
      %cst_47 = arith.constant dense<0.000000e+00> : vector<8xf32>
      %58 = vector.multi_reduction <add>, %57, %cst_47 [1] : vector<8x80xf32> to vector<8xf32>
      %59 = vector.shape_cast %58 : vector<8xf32> to vector<8x1xf32>
      %60 = arith.addf %56, %59 : vector<8x1xf32>
      %c0_48 = arith.constant 0 : index
      %c0_49 = arith.constant 0 : index
      %61 = vector.load %arg10[%c0_48, %c0_49] : memref<8x1xf32, #tpu.memory_space<vmem>>, vector<8x1xf32>
      tpu.vector_store %arg10[%c0_48, %c0_49], %60 {strides = array<i32>} : memref<8x1xf32, #tpu.memory_space<vmem>>, vector<8x1xf32>,
    } else {
    }
    %c1_i32 = arith.constant 1 : i32
    %45 = arith.cmpi eq, %arg0, %c1_i32 : i32
    %46 = arith.extui %45 : i1 to i32
    %c0_i32_37 = arith.constant 0 : i32
    %47 = arith.cmpi ne, %46, %c0_i32_37 : i32
    scf.if %47 {
      %c0_38 = arith.constant 0 : index
      %c0_39 = arith.constant 0 : index
      %48 = vector.load %arg9[%c0_38, %c0_39] : memref<8x1xf32, #tpu.memory_space<vmem>>, vector<8x1xf32>
      %cst_40 = arith.constant 7.812500e-03 : f32
      %49 = vector.broadcast %cst_40 : f32 to vector<8x1xf32>
      %50 = arith.mulf %48, %49 : vector<8x1xf32>
      %c0_41 = arith.constant 0 : index
      %c0_42 = arith.constant 0 : index
      %51 = vector.load %arg10[%c0_41, %c0_42] : memref<8x1xf32, #tpu.memory_space<vmem>>, vector<8x1xf32>
      %cst_43 = arith.constant 7.812500e-03 : f32
      %52 = vector.broadcast %cst_43 : f32 to vector<8x1xf32>
      %53 = arith.mulf %51, %52 : vector<8x1xf32>
      %54 = arith.mulf %50, %50 : vector<8x1xf32>
      %55 = arith.subf %53, %54 : vector<8x1xf32>
      %cst_44 = arith.constant 0.000000e+00 : f32
      %56 = vector.broadcast %cst_44 : f32 to vector<8x1xf32>
      %57 = arith.maximumf %55, %56 : vector<8x1xf32>
      %c0_45 = arith.constant 0 : index
      %c0_46 = arith.constant 0 : index
      %58 = vector.load %arg4[%c0_45, %c0_46] : memref<8x1xf32, #tpu.memory_space<vmem>>, vector<8x1xf32>
      %cst_47 = arith.constant 9.99999974E-6 : f32
      %59 = vector.broadcast %cst_47 : f32 to vector<8x1xf32>
      %60 = arith.addf %57, %59 : vector<8x1xf32>
      %61 = math.rsqrt %60 : vector<8x1xf32>
      %62 = arith.mulf %58, %61 : vector<8x1xf32>
      %c0_48 = arith.constant 0 : index
      %c0_49 = arith.constant 0 : index
      %63 = vector.load %arg5[%c0_48, %c0_49] : memref<8x1xf32, #tpu.memory_space<vmem>>, vector<8x1xf32>
      %64 = arith.mulf %50, %62 : vector<8x1xf32>
      %65 = arith.subf %63, %64 : vector<8x1xf32>
      %66 = vector.broadcast %62 : vector<8x1xf32> to vector<8x80xf32>
      %67 = arith.mulf %41, %66 : vector<8x80xf32>
      %68 = vector.broadcast %65 : vector<8x1xf32> to vector<8x80xf32>
      %69 = arith.addf %67, %68 : vector<8x80xf32>
      %c0_50 = arith.constant 0 : index
      %70 = memref.load %arg7[%c0_50] : memref<1xf32, #tpu.memory_space<smem>>
      %cst_51 = arith.constant 0.000000e+00 : f32
      %71 = vector.broadcast %cst_51 : f32 to vector<8x80xf32>
      %72 = arith.cmpf oge, %69, %71 : vector<8x80xf32>
      %73 = vector.broadcast %70 : f32 to vector<8x80xf32>
      %74 = arith.mulf %73, %69 : vector<8x80xf32>
      %75 = arith.select %72, %69, %74 : vector<8x80xi1>, vector<8x80xf32>
      %76 = arith.truncf %75 : vector<8x80xf32> to vector<8x80xbf16>
      %c0_52 = arith.constant 0 : index
      %c0_53 = arith.constant 0 : index
      %c0_54 = arith.constant 0 : index
      %77 = vector.load %arg8[%c0_52, %c0_53, %c0_54] : memref<1x8x80xbf16, #tpu.memory_space<vmem>>, vector<1x8x80xbf16>
      %78 = vector.shape_cast %77 : vector<1x8x80xbf16> to vector<8x80xbf16>
      %79 = vector.shape_cast %76 : vector<8x80xbf16> to vector<1x8x80xbf16>
      tpu.vector_store %arg8[%c0_52, %c0_53, %c0_54], %79 {strides = array<i32>} : memref<1x8x80xbf16, #tpu.memory_space<vmem>>, vector<1x8x80xbf16>,
    } else {
    }
    return
  }
  func.func @transform_0(%arg0: i32, %arg1: i32) -> (i32, i32, i32) {
    %c0_i32 = arith.constant 0 : i32
    %c0_i32_0 = arith.constant 0 : i32
    %c0_i32_1 = arith.constant 0 : i32
    %c0_i32_2 = arith.constant 0 : i32
    return %c0_i32, %c0_i32_0, %c0_i32_1 : i32, i32, i32
  }
  func.func @transform_1(%arg0: i32, %arg1: i32) -> (i32, i32, i32) {
    %c0_i32 = arith.constant 0 : i32
    %c0_i32_0 = arith.constant 0 : i32
    %c0_i32_1 = arith.constant 0 : i32
    return %arg1, %c0_i32, %c0_i32_0 : i32, i32, i32
  }
  func.func @transform_2(%arg0: i32, %arg1: i32) -> (i32, i32) {
    %c0_i32 = arith.constant 0 : i32
    %c0_i32_0 = arith.constant 0 : i32
    %c0_i32_1 = arith.constant 0 : i32
    return %c0_i32, %c0_i32_0 : i32, i32
  }
  func.func @transform_3(%arg0: i32, %arg1: i32) -> (i32, i32) {
    %c0_i32 = arith.constant 0 : i32
    %c0_i32_0 = arith.constant 0 : i32
    %c0_i32_1 = arith.constant 0 : i32
    return %c0_i32, %c0_i32_0 : i32, i32
  }
  func.func @transform_4(%arg0: i32, %arg1: i32) -> (i32, i32) {
    %c0_i32 = arith.constant 0 : i32
    %c0_i32_0 = arith.constant 0 : i32
    %c0_i32_1 = arith.constant 0 : i32
    return %c0_i32, %c0_i32_0 : i32, i32
  }
  func.func @transform_5(%arg0: i32, %arg1: i32) -> i32 {
    %c0_i32 = arith.constant 0 : i32
    %c0_i32_0 = arith.constant 0 : i32
    return %c0_i32 : i32
  }
  func.func @transform_6(%arg0: i32, %arg1: i32) -> (i32, i32, i32) {
    %0 = arith.muli %arg1, %arg0 : i32
    %c0_i32 = arith.constant 0 : i32
    %c0_i32_0 = arith.constant 0 : i32
    %c0_i32_1 = arith.constant 0 : i32
    return %0, %c0_i32, %c0_i32_0 : i32, i32, i32
  }
}

</mosaic_0001>

<llo_original>
// kernel: tpu_custom_call.1
$region0: #{tpu_custom_call.1}
  #allocation0 [shape = 'u32[]', space=smem, size = 0x4, offset = 0x4, fixed_abs, tag = 'smem constant byte address 0x4 - core index']
  #allocation1 [shape = 'u32[72,128]{1,0:T(1,128)}', space=vmem, size = 0x9000, scoped, tag = 'internal scratch']
  #allocation2 [shape = 'f32[8,1]{1,0:T(8,128)}', space=vmem, size = 0x1000, scoped, tag = 'scratch operand']
  #allocation3 [shape = 'f32[8,1]{1,0:T(8,128)}', space=vmem, size = 0x1000, scoped, tag = 'scratch operand']
  #allocation4 [shape = 'f32[1]{0:T(128)S(6)}', space=smem, size = 0x200, scoped, tag = 'scoped memory for tpu_custom_call.1']
  %s0 = inlined_call_operand.hbm [shape: bf16[6,8,8], index: 0, kind: input, shape index: {}]
  %s1 = inlined_call_operand.vmem [shape: bf16[2,8,100], index: 1, kind: input, shape index: {}]
  %s2 = inlined_call_operand.vmem [shape: f32[8,1], index: 2, kind: input, shape index: {}]
  %s3 = inlined_call_operand.vmem [shape: f32[8,1], index: 3, kind: input, shape index: {}]
  %s4 = inlined_call_operand.vmem [shape: f32[1,80], index: 4, kind: input, shape index: {}]
  %s5 = inlined_call_operand.<no memory space> [shape: f32[1], index: 5, kind: input, shape index: {}]
  %s6 = inlined_call_operand.hbm [shape: bf16[2,8,80], index: 6, kind: output, shape index: {}]
  %s7 = sld [smem:[#allocation0]]
  $region73: #{tpu_custom_call.1} parent=0
    _
  %s9 = ssub.s32 1, %s7
  %s10 = scalar_select 0, %s9, %s7
  %11 = sst [smem:[#allocation4]] %s5
  $region1: #{tpu_custom_call.1} parent=0
    #allocation5 [shape = 'u8[12288]{0}', space=vmem, size = 0x3000, scoped, tag = 'input window, operand 0, single buffered']
    #allocation6 [shape = 's32[2]{0}', space=sflag, size = 0x8, scoped, tag = 'scoped memory for tpu_custom_call.1']
    #allocation7 [shape = 's32[2]{0}', space=sflag, size = 0x8, scoped, tag = 'scoped memory for tpu_custom_call.1']
    #allocation8 [shape = 'u8[4096]{0}', space=vmem, size = 0x1000, scoped, tag = 'output window, operand 0']
    %12 = vsyncpa [#allocation6], 0
    %13 = vsyncpa [#allocation7], 0
    %s14 = scalar_lea.sflag [#allocation7], 1
    %15 = vsyncpa %s14, 0
    loop: start=0, step=1, limit=6
    $region2: #{tpu_custom_call.1} parent=1 // loop_pre_header
      _
    $region3: #{tpu_custom_call.1} parent=1 // loop_header
      %s17 = sphi 0, %s21
      %p18 = scmp.ge.s32.totalorder %s17, 6
      %s24 = sphi 0, %s36
      %s25 = sphi 0, %s32
      %s26 = sphi 0, %s24
      %s27 = sphi 0, %s25
      %s28 = sphi 0, %s26
      %s29 = sphi 0, %s27
      %s37 = sphi 0, %s37
      %s39 = sphi 0, %s37
      %s40 = sphi 0, %s39
      %s54 = sphi 0, %s40
      %s60 = sphi 0, %s62
      %s63 = sphi 0, %s60
      %s64 = sphi 0, %s63
      %s80 = sphi 0, %s64
      %s84 = sphi 0, %s84
      %s86 = sphi 0, %s84
      %s87 = sphi 0, %s86
      %s101 = sphi 0, %s87
      %s105 = sphi 0, %s105
      %s107 = sphi 0, %s105
      %s108 = sphi 0, %s107
      %s122 = sphi 0, %s108
      %s126 = sphi 0, %s126
      %s128 = sphi 0, %s126
      %s129 = sphi 0, %s128
      %s143 = sphi 0, %s129
      %s147 = sphi 0, %s147
      %s149 = sphi 0, %s147
      %s150 = sphi 0, %s149
      %s164 = sphi 0, %s150
      %s172 = sphi 0, %s174
      %s175 = sphi 0, %s172
      %s176 = sphi 0, %s175
      %s192 = sphi 0, %s176
    $region4: #{tpu_custom_call.1} parent=1 // loop_header_branch
      %20 = sbr.rel (%p18) target = $region8
    $region5: #{tpu_custom_call.1} parent=1 // loop_body
      %s22 = ssub.s32 %s17, 1
      %s23 = ssub.s32 %s17, 2
      %s30 = sadd.s32 1, %s25
      %p31 = scmp.ge.s32.totalorder %s30, 2
      %s32 = scalar_select %p31, 0, %s30
      %s33 = sadd.s32 1, %s24
      %s34 = scalar_select %p31, %s33, %s24
      %p35 = scmp.ge.s32.totalorder %s34, 2
      %s36 = scalar_select %p35, 0, %s34
      %s38 = sadd.s32 %s37, 1
      %p41 = scmp.eq.s32.totalorder %s17, 3
      %p42 = scmp.ne.s32.totalorder %s37, %s39
      %p43 = scmp.eq.s32.totalorder %s17, 0
      %p44 = por %p42, %p43
      %p45 = scmp.ne.s32.totalorder %s37, %s39
      %p46 = scmp.eq.s32.totalorder %s22, 3
      %p47 = por %p45, %p46
      %p48 = scmp.ne.s32.totalorder %s39, %s40
      %p49 = scmp.eq.s32.totalorder %s22, 0
      %p50 = por %p48, %p49
      %p51 = scmp.ne.s32.totalorder %s39, %s40
      %p52 = scmp.eq.s32.totalorder %s23, 3
      %p53 = por %p51, %p52
      %p55 = scmp.ne.s32.totalorder %s40, %s54
      %p56 = scmp.eq.s32.totalorder %s23, 0
      %p57 = por %p55, %p56
      %s58 = ssub.s32 %s25, %s32
      %p59 = scmp.eq.s32.totalorder %s58, 0
      %s61 = sadd.s32 %s60, 1
      %s62 = scalar_select %p59, %s60, %s61
      %p65 = pneg %p59
      %p66 = scmp.eq.s32.totalorder %s17, 3
      %p67 = por %p65, %p66
      %p68 = scmp.ne.s32.totalorder %s60, %s63
      %p69 = scmp.eq.s32.totalorder %s17, 0
      %p70 = por %p68, %p69
      %p71 = scmp.ne.s32.totalorder %s60, %s63
      %p72 = scmp.eq.s32.totalorder %s22, 3
      %p73 = por %p71, %p72
      %p74 = scmp.ne.s32.totalorder %s63, %s64
      %p75 = scmp.eq.s32.totalorder %s22, 0
      %p76 = por %p74, %p75
      %p77 = scmp.ne.s32.totalorder %s63, %s64
      %p78 = scmp.eq.s32.totalorder %s23, 3
      %p79 = por %p77, %p78
      %p81 = scmp.ne.s32.totalorder %s64, %s80
      %p82 = scmp.eq.s32.totalorder %s23, 0
      %p83 = por %p81, %p82
      %s85 = sadd.s32 %s84, 1
      %p88 = scmp.eq.s32.totalorder %s17, 3
      %p89 = scmp.ne.s32.totalorder %s84, %s86
      %p90 = scmp.eq.s32.totalorder %s17, 0
      %p91 = por %p89, %p90
      %p92 = scmp.ne.s32.totalorder %s84, %s86
      %p93 = scmp.eq.s32.totalorder %s22, 3
      %p94 = por %p92, %p93
      %p95 = scmp.ne.s32.totalorder %s86, %s87
      %p96 = scmp.eq.s32.totalorder %s22, 0
      %p97 = por %p95, %p96
      %p98 = scmp.ne.s32.totalorder %s86, %s87
      %p99 = scmp.eq.s32.totalorder %s23, 3
      %p100 = por %p98, %p99
      %p102 = scmp.ne.s32.totalorder %s87, %s101
      %p103 = scmp.eq.s32.totalorder %s23, 0
      %p104 = por %p102, %p103
      %s106 = sadd.s32 %s105, 1
      %p109 = scmp.eq.s32.totalorder %s17, 3
      %p110 = scmp.ne.s32.totalorder %s105, %s107
      %p111 = scmp.eq.s32.totalorder %s17, 0
      %p112 = por %p110, %p111
      %p113 = scmp.ne.s32.totalorder %s105, %s107
      %p114 = scmp.eq.s32.totalorder %s22, 3
      %p115 = por %p113, %p114
      %p116 = scmp.ne.s32.totalorder %s107, %s108
      %p117 = scmp.eq.s32.totalorder %s22, 0
      %p118 = por %p116, %p117
      %p119 = scmp.ne.s32.totalorder %s107, %s108
      %p120 = scmp.eq.s32.totalorder %s23, 3
      %p121 = por %p119, %p120
      %p123 = scmp.ne.s32.totalorder %s108, %s122
      %p124 = scmp.eq.s32.totalorder %s23, 0
      %p125 = por %p123, %p124
      %s127 = sadd.s32 %s126, 1
      %p130 = scmp.eq.s32.totalorder %s17, 3
      %p131 = scmp.ne.s32.totalorder %s126, %s128
      %p132 = scmp.eq.s32.totalorder %s17, 0
      %p133 = por %p131, %p132
      %p134 = scmp.ne.s32.totalorder %s126, %s128
      %p135 = scmp.eq.s32.totalorder %s22, 3
      %p136 = por %p134, %p135
      %p137 = scmp.ne.s32.totalorder %s128, %s129
      %p138 = scmp.eq.s32.totalorder %s22, 0
      %p139 = por %p137, %p138
      %p140 = scmp.ne.s32.totalorder %s128, %s129
      %p141 = scmp.eq.s32.totalorder %s23, 3
      %p142 = por %p140, %p141
      %p144 = scmp.ne.s32.totalorder %s129, %s143
      %p145 = scmp.eq.s32.totalorder %s23, 0
      %p146 = por %p144, %p145
      %s148 = sadd.s32 %s147, 1
      %p151 = scmp.eq.s32.totalorder %s17, 3
      %p152 = scmp.ne.s32.totalorder %s147, %s149
      %p153 = scmp.eq.s32.totalorder %s17, 0
      %p154 = por %p152, %p153
      %p155 = scmp.ne.s32.totalorder %s147, %s149
      %p156 = scmp.eq.s32.totalorder %s22, 3
      %p157 = por %p155, %p156
      %p158 = scmp.ne.s32.totalorder %s149, %s150
      %p159 = scmp.eq.s32.totalorder %s22, 0
      %p160 = por %p158, %p159
      %p161 = scmp.ne.s32.totalorder %s149, %s150
      %p162 = scmp.eq.s32.totalorder %s23, 3
      %p163 = por %p161, %p162
      %p165 = scmp.ne.s32.totalorder %s150, %s164
      %p166 = scmp.eq.s32.totalorder %s23, 0
      %p167 = por %p165, %p166
      %s168 = smul.u32 %s25, %s24
      %s169 = smul.u32 %s32, %s36
      %s170 = ssub.s32 %s168, %s169
      %p171 = scmp.eq.s32.totalorder %s170, 0
      %s173 = sadd.s32 %s172, 1
      %s174 = scalar_select %p171, %s172, %s173
      %p177 = pneg %p171
      %p178 = scmp.eq.s32.totalorder %s17, 3
      %p179 = por %p177, %p178
      %p180 = scmp.ne.s32.totalorder %s172, %s175
      %p181 = scmp.eq.s32.totalorder %s17, 0
      %p182 = por %p180, %p181
      %p183 = scmp.ne.s32.totalorder %s172, %s175
      %p184 = scmp.eq.s32.totalorder %s22, 3
      %p185 = por %p183, %p184
      %p186 = scmp.ne.s32.totalorder %s175, %s176
      %p187 = scmp.eq.s32.totalorder %s22, 0
      %p188 = por %p186, %p187
      %p189 = scmp.ne.s32.totalorder %s175, %s176
      %p190 = scmp.eq.s32.totalorder %s23, 3
      %p191 = por %p189, %p190
      %p193 = scmp.ne.s32.totalorder %s176, %s192
      %p194 = scmp.eq.s32.totalorder %s23, 0
      %p195 = por %p193, %p194
      %p196 = scmp.le.s32.totalorder 1, %s17
      %p197 = scmp.lt.s32.totalorder %s17, 5
      %p198 = pnand %p196, %p197
      %p199 = pneg %p198
      // Predicated region
      $region9: #{tpu_custom_call.1} parent=5 // pred_check
        _
      $region10: #{tpu_custom_call.1} parent=5 // pred_check_branch
        %201 = sbr.rel (%p198) target = $region12
      $region11: #{tpu_custom_call.1} parent=5 // pred_region
        %s202 = ssub.s32 %s17, 1
        // Predicated region
        $region13: #{tpu_custom_call.1} parent=11 // pred_check
          %p203 = pneg %p50
        $region14: #{tpu_custom_call.1} parent=11 // pred_check_branch
          %205 = sbr.rel (%p203) target = $region16
        $region15: #{tpu_custom_call.1} parent=11 // pred_region
          %207 = vsyncadd [#allocation6], 0
          %s208 = sshll.u32 %s0, 4
          %s209 = int_to_ptr.hbm [resolvable:$true] %s208
          %s210 = sshll.u32 [#allocation5], 4
          %s211 = int_to_ptr.vmem [resolvable:$true] %s210
          %216 = dma.hbm_to_vmem [thread:$0]  %s209, 384, %s211, [#allocation6], 64, 64, 4
        $region16: #{tpu_custom_call.1} parent=11 // pred_fallthru
          _
        // Predicated region
        $region17: #{tpu_custom_call.1} parent=11 // pred_check
          %p217 = pneg %p97
        $region18: #{tpu_custom_call.1} parent=11 // pred_check_branch
          %219 = sbr.rel (%p217) target = $region20
        $region19: #{tpu_custom_call.1} parent=11 // pred_region
          _
        $region20: #{tpu_custom_call.1} parent=11 // pred_fallthru
          _
        // Predicated region
        $region21: #{tpu_custom_call.1} parent=11 // pred_check
          %p220 = pneg %p118
        $region22: #{tpu_custom_call.1} parent=11 // pred_check_branch
          %222 = sbr.rel (%p220) target = $region24
        $region23: #{tpu_custom_call.1} parent=11 // pred_region
          _
        $region24: #{tpu_custom_call.1} parent=11 // pred_fallthru
          _
        // Predicated region
        $region25: #{tpu_custom_call.1} parent=11 // pred_check
          %p223 = pneg %p139
        $region26: #{tpu_custom_call.1} parent=11 // pred_check_branch
          %225 = sbr.rel (%p223) target = $region28
        $region27: #{tpu_custom_call.1} parent=11 // pred_region
          _
        $region28: #{tpu_custom_call.1} parent=11 // pred_fallthru
          _
        // Predicated region
        $region29: #{tpu_custom_call.1} parent=11 // pred_check
          %p226 = pneg %p160
        $region30: #{tpu_custom_call.1} parent=11 // pred_check_branch
          %228 = sbr.rel (%p226) target = $region32
        $region31: #{tpu_custom_call.1} parent=11 // pred_region
          _
        $region32: #{tpu_custom_call.1} parent=11 // pred_fallthru
          _
      $region12: #{tpu_custom_call.1} parent=5 // pred_fallthru
        _
      %p229 = scmp.lt.s32.totalorder %s17, 4
      // Predicated region
      $region33: #{tpu_custom_call.1} parent=5 // pred_check
        %p230 = pneg %p229
      $region34: #{tpu_custom_call.1} parent=5 // pred_check_branch
        %232 = sbr.rel (%p230) target = $region36
      $region35: #{tpu_custom_call.1} parent=5 // pred_region
        // Predicated region
        $region37: #{tpu_custom_call.1} parent=35 // pred_check
          %p233 = pneg %p70
        $region38: #{tpu_custom_call.1} parent=35 // pred_check_branch
          %235 = sbr.rel (%p233) target = $region40
        $region39: #{tpu_custom_call.1} parent=35 // pred_region
          %p236 = scmp.lt.s32.totalorder %s25, 1
          %s237 = scalar_select %p236, %s25, 1
          %s238 = smul.addr %s237, 4
          %s239 = scalar_lea.vmem %s1, %s238
        $region40: #{tpu_custom_call.1} parent=35 // pred_fallthru
          _
      $region36: #{tpu_custom_call.1} parent=5 // pred_fallthru
        _
      %p240 = scmp.le.s32.totalorder 1, %s17
      %p241 = scmp.lt.s32.totalorder %s17, 5
      %p242 = pnand %p240, %p241
      %p243 = pneg %p242
      // Predicated region
      $region41: #{tpu_custom_call.1} parent=5 // pred_check
        _
      $region42: #{tpu_custom_call.1} parent=5 // pred_check_branch
        %245 = sbr.rel (%p242) target = $region44
      $region43: #{tpu_custom_call.1} parent=5 // pred_region
        %s246 = ssub.s32 %s17, 1
        // Predicated region
        $region45: #{tpu_custom_call.1} parent=43 // pred_check
          %p247 = pneg %p50
        $region46: #{tpu_custom_call.1} parent=43 // pred_check_branch
          %249 = sbr.rel (%p247) target = $region48
        $region47: #{tpu_custom_call.1} parent=43 // pred_region
          %251 = dma.done [#allocation6], 384
        $region48: #{tpu_custom_call.1} parent=43 // pred_fallthru
          _
        %p252 = pneg %p50
        %p253 = pneg %p47
        %p254 = scmp.lt.s32.totalorder %s27, 1
        %s255 = scalar_select %p254, %s27, 1
        %s256 = smul.addr %s255, 4
        %s257 = scalar_lea.vmem %s1, %s256
        %p258 = pneg %p76
        %p259 = pneg %p73
        %p260 = pneg %p97
        %p261 = pneg %p94
        %p262 = pneg %p118
        %p263 = pneg %p115
        %p264 = pneg %p139
        %p265 = pneg %p136
        %p266 = pneg %p160
        %p267 = pneg %p157
        %p268 = pneg %p188
        %p269 = pneg %p185
        %s270 = sand.u32 %s175, 1
        %s271 = scalar_lea.sflag [#allocation7], %s270
        %s272 = sand.u32 %s175, 1
        %s273 = smul.addr %s272, 4
        %s274 = scalar_lea.vmem [#allocation8], %s273
        %p275 = scmp.lt.s32.totalorder %s27, 1
        %s276 = scalar_select %p275, %s27, 1
        %s277 = smul.addr %s276, 4
        %s278 = scalar_lea.vmem %s1, %s277
        %s279 = smul.u32 %s27, %s26
        %p281 = scmp.eq.s32.totalorder %s26, 0
        %p282 = scmp.eq.s32.totalorder %s27, 0
        %p283 = pnand %p281, %p282
        %p284 = pneg %p283
        // Predicated region
        $region49: #{tpu_custom_call.1} parent=43 // pred_check
          _
        $region50: #{tpu_custom_call.1} parent=43 // pred_check_branch
          %286 = sbr.rel (%p283) target = $region52
        $region51: #{tpu_custom_call.1} parent=43 // pred_region
          %vm287 = vcmask 7168
          %288 = vst.msk [vmem:[#allocation2] sm:$0xff] %vm287, 0.0
          %289 = vst.msk [vmem:[#allocation3] sm:$0xff] %vm287, 0.0
        $region52: #{tpu_custom_call.1} parent=43 // pred_fallthru
          _
        %v290 = vld [vmem:[#allocation5] sm:$0xf]
        %v291 = vld [vmem:[%s278] sm:$0xf]
        %s292 = scalar_lea.vmem [#allocation5], 4
        %v293 = vld [vmem:[%s292] sm:$0xf]
        %v295 = vunpack.c.l.b16 %v291
        %v296 = vpack.c.b16 %v295, %v295
        %297 = vrot.lane.b32.xlu0 %v296, 127
        %v298 = vpop.permute.xlu0 %297
        %vm299 = vcmask 64512
        %v301 = vsel %vm299, %v293, 0
        %vm303 = vcmask 1043456
        %v305 = vsel %vm303, %v298, 0
        %307 = vmatpush.bf16.msra.mxu0 0
        %308 = vmatpush.bf16.msra.mxu0 0
        %309 = vmatpush.bf16.msra.mxu0 0
        %310 = vmatpush.bf16.msra.mxu0 0
        %311 = vmatpush.bf16.msra.mxu0 0
        %312 = vmatpush.bf16.msra.mxu0 0
        %313 = vmatpush.bf16.msra.mxu0 0
        %314 = vmatpush.bf16.msra.mxu0 %v305
        %315 = vmatmul.bf16.gmra.mxu0 %v301
        %v316 = vpop.f32.mrf.mxu0
        %v317 = vadd.f32 0.0, %v316
        %v318 = vpop.f32.mrf.mxu0
        %319 = vdwg.mxu0
        %v321 = vsel %vm299, %v290, 0
        %v324 = vsel %vm303, %v291, 0
        %326 = vmatpush.bf16.msra.mxu0 0
        %327 = vmatpush.bf16.msra.mxu0 0
        %328 = vmatpush.bf16.msra.mxu0 0
        %329 = vmatpush.bf16.msra.mxu0 0
        %330 = vmatpush.bf16.msra.mxu0 0
        %331 = vmatpush.bf16.msra.mxu0 0
        %332 = vmatpush.bf16.msra.mxu0 0
        %333 = vmatpush.bf16.msra.mxu0 %v324
        %334 = vmatmul.bf16.gmra.mxu0 %v321
        %v335 = vpop.f32.mrf.mxu0
        %v336 = vadd.f32 %v317, %v335
        %v337 = vpop.f32.mrf.mxu0
        %338 = vdwg.mxu0
        %s339 = scalar_lea.vmem [#allocation5], 8
        %v340 = vld [vmem:[%s339] sm:$0xf]
        %341 = vrot.lane.b32.xlu0 %v296, 126
        %v342 = vpop.permute.xlu0 %341
        %v344 = vsel %vm299, %v340, 0
        %v347 = vsel %vm303, %v342, 0
        %349 = vmatpush.bf16.msra.mxu0 0
        %350 = vmatpush.bf16.msra.mxu0 0
        %351 = vmatpush.bf16.msra.mxu0 0
        %352 = vmatpush.bf16.msra.mxu0 0
        %353 = vmatpush.bf16.msra.mxu0 0
        %354 = vmatpush.bf16.msra.mxu0 0
        %355 = vmatpush.bf16.msra.mxu0 0
        %356 = vmatpush.bf16.msra.mxu0 %v347
        %357 = vmatmul.bf16.gmra.mxu0 %v344
        %v358 = vpop.f32.mrf.mxu0
        %v359 = vadd.f32 0.0, %v358
        %v360 = vpop.f32.mrf.mxu0
        %361 = vdwg.mxu0
        %v362 = vadd.f32 %v336, %v359
        %s363 = scalar_lea.vmem [#allocation5], 12
        %v364 = vld [vmem:[%s363] sm:$0xf]
        %365 = vrot.lane.b32.xlu0 %v296, 118
        %v366 = vpop.permute.xlu0 %365
        %v368 = vsel %vm299, %v364, 0
        %v371 = vsel %vm303, %v366, 0
        %373 = vmatpush.bf16.msra.mxu0 0
        %374 = vmatpush.bf16.msra.mxu0 0
        %375 = vmatpush.bf16.msra.mxu0 0
        %376 = vmatpush.bf16.msra.mxu0 0
        %377 = vmatpush.bf16.msra.mxu0 0
        %378 = vmatpush.bf16.msra.mxu0 0
        %379 = vmatpush.bf16.msra.mxu0 0
        %380 = vmatpush.bf16.msra.mxu0 %v371
        %381 = vmatmul.bf16.gmra.mxu0 %v368
        %v382 = vpop.f32.mrf.mxu0
        %v383 = vadd.f32 0.0, %v382
        %v384 = vpop.f32.mrf.mxu0
        %385 = vdwg.mxu0
        %v386 = vadd.f32 %v362, %v383
        %s387 = scalar_lea.vmem [#allocation5], 16
        %v388 = vld [vmem:[%s387] sm:$0xf]
        %389 = vrot.lane.b32.xlu0 %v296, 117
        %v390 = vpop.permute.xlu0 %389
        %v392 = vsel %vm299, %v388, 0
        %v395 = vsel %vm303, %v390, 0
        %397 = vmatpush.bf16.msra.mxu0 0
        %398 = vmatpush.bf16.msra.mxu0 0
        %399 = vmatpush.bf16.msra.mxu0 0
        %400 = vmatpush.bf16.msra.mxu0 0
        %401 = vmatpush.bf16.msra.mxu0 0
        %402 = vmatpush.bf16.msra.mxu0 0
        %403 = vmatpush.bf16.msra.mxu0 0
        %404 = vmatpush.bf16.msra.mxu0 %v395
        %405 = vmatmul.bf16.gmra.mxu0 %v392
        %v406 = vpop.f32.mrf.mxu0
        %v407 = vadd.f32 0.0, %v406
        %v408 = vpop.f32.mrf.mxu0
        %409 = vdwg.mxu0
        %v410 = vadd.f32 %v386, %v407
        %s411 = scalar_lea.vmem [#allocation5], 20
        %v412 = vld [vmem:[%s411] sm:$0xf]
        %413 = vrot.lane.b32.xlu0 %v296, 116
        %v414 = vpop.permute.xlu0 %413
        %v416 = vsel %vm299, %v412, 0
        %v419 = vsel %vm303, %v414, 0
        %421 = vmatpush.bf16.msra.mxu0 0
        %422 = vmatpush.bf16.msra.mxu0 0
        %423 = vmatpush.bf16.msra.mxu0 0
        %424 = vmatpush.bf16.msra.mxu0 0
        %425 = vmatpush.bf16.msra.mxu0 0
        %426 = vmatpush.bf16.msra.mxu0 0
        %427 = vmatpush.bf16.msra.mxu0 0
        %428 = vmatpush.bf16.msra.mxu0 %v419
        %429 = vmatmul.bf16.gmra.mxu0 %v416
        %v430 = vpop.f32.mrf.mxu0
        %v431 = vadd.f32 0.0, %v430
        %v432 = vpop.f32.mrf.mxu0
        %433 = vdwg.mxu0
        %v434 = vadd.f32 %v410, %v431
        // Predicated region
        $region53: #{tpu_custom_call.1} parent=43 // pred_check
          %p435 = pneg %p281
        $region54: #{tpu_custom_call.1} parent=43 // pred_check_branch
          %437 = sbr.rel (%p435) target = $region56
        $region55: #{tpu_custom_call.1} parent=43 // pred_region
          %v438 = vld [vmem:[%s4] sm:$0x1]
          %v440 = vperm.slane %v438, 0
          %v442 = vmul.f32 %v434, %v440
          %v443 = vld [vmem:[#allocation2] sm:$0xff]
          %vm444 = vcmask 654336
          %v445 = vsel %vm444, %v442, 0.0
          %446 = vadd.xlane.f32.xlu0 %v445
          %v447 = vpop.xlane.xlu0 %446
          %v448 = vadd.f32 %v443, %v447
          %vm449 = vcmask 7168
          %450 = vst.msk [vmem:[#allocation2] sm:$0xff] %vm449, %v448
          %v451 = vld [vmem:[#allocation3] sm:$0xff]
          %v452 = vmul.f32 %v442, %v442
          %v453 = vsel %vm444, %v452, 0.0
          %454 = vadd.xlane.f32.xlu0 %v453
          %v455 = vpop.xlane.xlu0 %454
          %v456 = vadd.f32 %v451, %v455
          %457 = vst.msk [vmem:[#allocation3] sm:$0xff] %vm449, %v456
        $region56: #{tpu_custom_call.1} parent=43 // pred_fallthru
          _
        %p458 = scmp.eq.s32.totalorder %s26, 1
        // Predicated region
        $region57: #{tpu_custom_call.1} parent=43 // pred_check
          %p459 = pneg %p458
        $region58: #{tpu_custom_call.1} parent=43 // pred_check_branch
          %461 = sbr.rel (%p459) target = $region60
        $region59: #{tpu_custom_call.1} parent=43 // pred_region
          %v462 = vld [vmem:[#allocation2] sm:$0xff]
          %v463 = vmul.f32 %v462, 0.0078125
          %v464 = vld [vmem:[#allocation3] sm:$0xff]
          %v465 = vmul.f32 %v464, 0.0078125
          %v466 = vmul.f32 %v463, %v463
          %v467 = vsub.f32 %v465, %v466
          %v468 = vmax.f32 %v467, 0.0
          %v469 = vld [vmem:[%s2] sm:$0xff]
          %v470 = vadd.f32 %v468, 1e-05
          %v471 = vrsqrt.pop %v470
          %v472 = vmul.f32 %v471, %v470
          %v473 = vmul.f32 %v472, %v471
          %v474 = vmul.f32 0.5, %v473
          %v475 = vsub.f32 1.5, %v474
          %v476 = vmul.f32 %v471, %v475
          %vm477 = vweird.f32 %v470
          %vm478 = vweird.f32 %v471
          %vm479 = vmor %vm477, %vm478
          %v480 = vsel %vm479, %v471, %v476
          %v481 = vmul.f32 %v469, %v480
          %v482 = vld [vmem:[%s3] sm:$0xff]
          %v483 = vmul.f32 %v463, %v481
          %v484 = vsub.f32 %v482, %v483
          %486 = vset.pattern.permute.xlu0 0
          %487 = vperm.xlu0 %486, %v481
          %v488 = vpop.permute.xlu0 %487
          %v490 = vmul.f32 %v434, %v488
          %492 = vset.pattern.permute.xlu0 0
          %493 = vperm.xlu0 %492, %v484
          %v494 = vpop.permute.xlu0 %493
          %v496 = vadd.f32 %v490, %v494
          %s497 = sld [smem:[#allocation4]]
          %vm498 = vcmp.ge.f32.partialorder %v496, 0.0
          %v499 = vstv %s497
          %v500 = vmul.f32 %v499, %v496
          %v501 = vsel %vm498, %v496, %v500
          %v502 = vpack.c.bf16 %v501, %v501
          %vm503 = vcmask 650240
          %504 = vst.msk [vmem:[%s274] sm:$0xf] %vm503, %v502
        $region60: #{tpu_custom_call.1} parent=43 // pred_fallthru
          _
        %s505 = sand.u32 %s175, 1
        %s506 = scalar_lea.sflag [#allocation7], %s505
        %s507 = sand.u32 %s175, 1
        %s508 = smul.addr %s507, 4
        %s509 = scalar_lea.vmem [#allocation8], %s508
        // Predicated region
        $region61: #{tpu_custom_call.1} parent=43 // pred_check
          %p510 = pneg %p185
        $region62: #{tpu_custom_call.1} parent=43 // pred_check_branch
          %512 = sbr.rel (%p510) target = $region64
        $region63: #{tpu_custom_call.1} parent=43 // pred_region
          %s513 = smul.u32 %s27, %s26
          %515 = vsyncadd %s506, 0
          %s516 = smul.addr %s513, 4
          %s517 = scalar_lea.hbm %s6, %s516
          %s519 = sshll.u32 %s509, 4
          %s520 = int_to_ptr.vmem [resolvable:$true] %s519
          %s521 = sshll.u32 %s517, 4
          %s522 = int_to_ptr.hbm [resolvable:$true] %s521
          %524 = dma.vmem_to_hbm [thread:$0]  %s520, 64, %s522, %s506
        $region64: #{tpu_custom_call.1} parent=43 // pred_fallthru
          _
      $region44: #{tpu_custom_call.1} parent=5 // pred_fallthru
        _
      %p525 = scmp.le.s32.totalorder 2, %s17
      // Predicated region
      $region65: #{tpu_custom_call.1} parent=5 // pred_check
        %p526 = pneg %p525
      $region66: #{tpu_custom_call.1} parent=5 // pred_check_branch
        %528 = sbr.rel (%p526) target = $region68
      $region67: #{tpu_custom_call.1} parent=5 // pred_region
        %s529 = ssub.s32 %s17, 2
        // Predicated region
        $region69: #{tpu_custom_call.1} parent=67 // pred_check
          %p530 = pneg %p191
        $region70: #{tpu_custom_call.1} parent=67 // pred_check_branch
          %532 = sbr.rel (%p530) target = $region72
        $region71: #{tpu_custom_call.1} parent=67 // pred_region
          %s533 = sand.u32 %s176, 1
          %s534 = scalar_lea.sflag [#allocation7], %s533
          %s535 = sand.u32 %s176, 1
          %s536 = smul.addr %s535, 4
          %s537 = scalar_lea.vmem [#allocation8], %s536
          %539 = dma.done %s534, 64
        $region72: #{tpu_custom_call.1} parent=67 // pred_fallthru
          _
      $region68: #{tpu_custom_call.1} parent=5 // pred_fallthru
        _
    $region6: #{tpu_custom_call.1} parent=1 // loop_footer
      %s21 = sadd.s32 1, %s17
    $region7: #{tpu_custom_call.1} parent=1 // loop_footer_branch
      %16 = sbr.rel target = $region3
    $region8: #{tpu_custom_call.1} parent=1 // loop_exit
      _
    %540 = vsyncpa [#allocation6], 1
    %s541 = scalar_lea.sflag [#allocation6], 1
    %542 = vsyncpa %s541, 1
    %543 = vsyncpa [#allocation7], 1
    %s544 = scalar_lea.sflag [#allocation7], 1
    %545 = vsyncpa %s544, 1

</llo_original>
